<compile_context>
chip_gen: v6e
topology: v6e:2x2x1
jax: 0.10.0
libtpu: 0.0.40
codegen_flags: <defaults>
</compile_context>

<pallas_src>
import functools

import jax
import jax.numpy as jnp
from jax.experimental import pallas as pl
from jax.experimental.pallas import tpu as pltpu


def toxic_head_kernel(seq_ref, w_ref, b_ref, out_ref, sum_acc, max_acc,
                      *, inv_seq, hidden):
    """Streamed pooling + concat-free linear head.

    seq_ref : (TB, TS, H)   bf16/f32 tile of the backbone sequence output
    w_ref   : (2H, O_pad)   f32 head weight (rows 0:H -> mean, H:2H -> max)
    b_ref   : (1, O_pad)    f32 bias
    out_ref : (TB, O_pad)   f32 output, resident across the seq (reduction) axis
    sum_acc : (TB, H)       f32 running-sum scratch
    max_acc : (TB, H)       f32 running-max scratch
    """
    s = pl.program_id(1)

    @pl.when(s == 0)
    def _init():
        sum_acc[...] = jnp.zeros_like(sum_acc)
        max_acc[...] = jnp.full_like(max_acc, -jnp.inf)

    tile = seq_ref[...]                                    # (TB, TS, H), bf16
    # f32 accumulation without materializing an f32 copy of the whole tile;
    # bf16 max is exact, so only the (TB, H) reduction result is cast up.
    sum_acc[...] = sum_acc[...] + jnp.sum(tile, axis=1, dtype=jnp.float32)
    max_acc[...] = jnp.maximum(max_acc[...],
                               jnp.max(tile, axis=1).astype(jnp.float32))

    @pl.when(s == pl.num_programs(1) - 1)
    def _finalize():
        apool = sum_acc[...] * inv_seq                     # mean = sum * 1/seq
        mpool = max_acc[...]
        # cat([apool, mpool], 1) @ W.T == apool @ W[:H] + mpool @ W[H:]
        out = jnp.dot(apool, w_ref[0:hidden, :],
                      preferred_element_type=jnp.float32)
        out = out + jnp.dot(mpool, w_ref[hidden:2 * hidden, :],
                            preferred_element_type=jnp.float32)
        # dropout(p=0.3) is identity in eval mode.
        # TODO(synk): training-mode dropout (Bernoulli mask) not applied; inference semantics only.
        out_ref[...] = out + b_ref[...]                    # bias broadcast over batch


def _vmem_bytes(tb, ts, hidden, o_pad, seq_itemsize):
    """Rough double-buffered VMEM footprint of one grid step."""
    seq_tile = 2 * tb * ts * hidden * seq_itemsize          # streamed activation tile
    weights = 2 * (2 * hidden) * o_pad * 4                  # resident head weight
    bias = 2 * 8 * o_pad * 4
    out = 2 * max(tb, 8) * o_pad * 4
    scratch = 2 * tb * hidden * 4
    return seq_tile + weights + bias + out + scratch


def _pick_ts(seq, tb, hidden, o_pad, seq_itemsize, target=512, budget=40 << 20):
    """Largest multiple-of-8 divisor of seq that is <= target and fits VMEM."""
    cands = [d for d in range(8, min(seq, target) + 1, 8) if seq % d == 0]
    if not cands:
        # TODO(synk): seq with no multiple-of-8 divisor -> single full-seq tile;
        # a remainder-tile path would be needed for very long odd sequences.
        return seq
    for ts in sorted(cands, reverse=True):
        if _vmem_bytes(tb, ts, hidden, o_pad, seq_itemsize) <= budget:
            return ts
    return cands[0]


def _pick_tb(bs, requested=None):
    """Returns (tb, bs_pad). Prefers no padding and >= 2 batch tiles (v7x megacore)."""
    if (requested is not None and bs % requested == 0
            and (requested % 8 == 0 or requested == bs)):
        return requested, bs
    # Multiple-of-8 divisors of bs that leave >= 2 batch tiles.
    for cand in (32, 24, 16, 8):
        if bs % cand == 0 and bs // cand >= 2:
            return cand, bs
    if bs <= 32:
        # Single whole-batch tile (block dim == full array dim, so any tb is legal).
        # With one batch tile a second v7x TensorCore idles -- inherent for tiny batches.
        return bs, bs
    for cand in (32, 24, 16, 8):
        if bs % cand == 0:
            return cand, bs
    # No clean tiling: pad batch to a multiple of 8.
    # TODO(synk): this jnp.pad copies the whole activation through HBM once; padded
    # rows are zeros (sum 0, max 0), flow through finalize harmlessly, and are sliced off.
    return 8, pl.cdiv(bs, 8) * 8


def toxic_simple_nn_forward(seq_x, linear_w, linear_b, *, tb=None, ts=None):
    """seq_x: (bs, seq, H) bf16/f32; linear_w: (O, 2H) torch layout; linear_b: (O,)."""
    bs, seq, hidden = seq_x.shape
    out_features = linear_w.shape[0]
    seq_itemsize = jnp.dtype(seq_x.dtype).itemsize

    # Lane-dense padded output width (avoids masked partial stores).
    o_pad = max(128, pl.cdiv(out_features, 128) * 128)

    tb, bs_pad = _pick_tb(bs, tb)
    if bs_pad != bs:
        seq_x = jnp.pad(seq_x, ((0, bs_pad - bs), (0, 0), (0, 0)))

    if ts is None or seq % ts != 0 or not (ts % 8 == 0 or ts == seq):
        ts = _pick_ts(seq, tb, hidden, o_pad, seq_itemsize)

    # Head weight: transpose once, keep as a single (2H, O_pad) operand; the
    # kernel slices the mean/max halves statically (no lane-axis concat).
    w_t = jnp.transpose(linear_w).astype(jnp.float32)               # (2H, O)
    w_pad = jnp.pad(w_t, ((0, 0), (0, o_pad - out_features)))       # (2H, O_pad)
    b2d = jnp.pad(linear_b.astype(jnp.float32),
                  (0, o_pad - out_features)).reshape(1, o_pad)

    # Explicit scoped-VMEM limit so v5e's 16 MiB default is not the ceiling;
    # capped at 64 MiB (v7x physical per TensorCore).
    needed = _vmem_bytes(tb, ts, hidden, o_pad, seq_itemsize)
    vmem_limit = int(min(max(needed + (4 << 20), 32 << 20), 64 << 20))

    kernel = functools.partial(toxic_head_kernel, inv_seq=1.0 / seq, hidden=hidden)

    out = pl.pallas_call(
        kernel,
        out_shape=jax.ShapeDtypeStruct((bs_pad, o_pad), jnp.float32),
        grid_spec=pltpu.PrefetchScalarGridSpec(
            num_scalar_prefetch=0,
            grid=(bs_pad // tb, seq // ts),
            in_specs=[
                # seq_x streamed tile-by-tile over (batch, seq).
                pl.BlockSpec((tb, ts, hidden), lambda b, s: (b, s, 0)),
                # Head weight / bias: full-array blocks, constant index_map
                # -> DMA'd once and kept resident for the whole grid.
                pl.BlockSpec((2 * hidden, o_pad), lambda b, s: (0, 0)),
                pl.BlockSpec((1, o_pad), lambda b, s: (0, 0)),
            ],
            # Output block resident across the seq (reduction) axis.
            out_specs=pl.BlockSpec((tb, o_pad), lambda b, s: (b, 0)),
            scratch_shapes=[
                pltpu.VMEM((tb, hidden), jnp.float32),   # running sum
                pltpu.VMEM((tb, hidden), jnp.float32),   # running max
            ],
        ),
        compiler_params=pltpu.CompilerParams(
            dimension_semantics=("parallel", "arbitrary"),
            vmem_limit_bytes=vmem_limit,
        ),
    )(seq_x, w_pad, b2d)

    return out[:bs, :out_features]


def reference_forward(seq_x, linear_w, linear_b):
    """Pure-JAX reference of the same head (correctness check)."""
    x = seq_x.astype(jnp.float32)
    apool = jnp.mean(x, axis=1)
    mpool = jnp.max(x, axis=1)
    feat = jnp.concatenate([apool, mpool], axis=-1)
    return feat @ linear_w.T + linear_b


if __name__ == "__main__":
    # --- synthetic configuration (small stand-ins for xlm-roberta-large) ---
    batch = 16
    seq_len = 64
    hidden = 32            # stand-in for backbone.pooler.dense.out_features (1024)
    use_aux = True
    out_features = 2 + (5 if use_aux else 0)   # = 7
    vocab = 64

    key = jax.random.PRNGKey(0)
    k_ids, k_emb, k_w, k_b = jax.random.split(key, 4)

    # Module inputs (as in forward(input_ids, attention_masks)).
    input_ids = jax.random.randint(k_ids, (batch, seq_len), 0, vocab, dtype=jnp.int32)
    attention_masks = jnp.ones((batch, seq_len), dtype=jnp.int32)
    # NOTE: attention_masks only feeds the backbone in the original module; the
    # pooling/linear head never reads it, so the stand-in ignores it too.

    # TODO(synk): XLM-RoBERTa backbone has no small synthetic Pallas equivalent;
    # replaced by a deterministic embedding lookup with the same (bs, seq, H) contract.
    embed_table = jax.random.normal(k_emb, (vocab, hidden), dtype=jnp.float32)
    seq_x = embed_table[input_ids].astype(jnp.bfloat16)        # stream in bf16

    # Linear(2*hidden -> out_features), deterministic init (torch layout (O, 2H)).
    linear_w = 0.02 * jax.random.normal(k_w, (out_features, 2 * hidden), dtype=jnp.float32)
    linear_b = 0.01 * jax.random.normal(k_b, (out_features,), dtype=jnp.float32)

    # tb=8 -> 2 batch tiles (exercises the parallel/megacore axis);
    # ts=16 -> 4 seq steps (exercises init / accumulate / finalize).
    out = toxic_simple_nn_forward(seq_x, linear_w, linear_b, tb=8, ts=16)
    out = jax.block_until_ready(out)

    ref = reference_forward(seq_x, linear_w, linear_b)
    assert out.shape == (batch, out_features), out.shape
    assert jnp.allclose(out, ref, atol=1e-4, rtol=1e-4), "mismatch vs JAX reference"

    print("KERNEL_OK")
</pallas_src>

<mosaic_0001>
module attributes {stable_mosaic.version = 11 : i64} {
  func.func @toxic_head_kernel(%arg0: i32, %arg1: i32, %arg2: memref<8x16x32xbf16, #tpu.memory_space<vmem>>, %arg3: memref<64x128xf32, #tpu.memory_space<vmem>>, %arg4: memref<1x128xf32, #tpu.memory_space<vmem>>, %arg5: memref<8x128xf32, #tpu.memory_space<vmem>>, %arg6: memref<8x32xf32, #tpu.memory_space<vmem>>, %arg7: memref<8x32xf32, #tpu.memory_space<vmem>>) attributes {dimension_semantics = [#tpu.dimension_semantics<parallel>, #tpu.dimension_semantics<arbitrary>], iteration_bounds = array<i64: 2, 4>, scalar_prefetch = 0 : i64, scratch_operands = 2 : i64, tpu.core_type = #tpu.core_type<tc>, window_params = [{transform_indices = @transform_0, window_bounds = array<i64: 8, 16, 32>}, {pipeline_mode = #tpu.pipeline_mode<synchronous>, transform_indices = @transform_1, window_bounds = array<i64: 64, 128>}, {pipeline_mode = #tpu.pipeline_mode<synchronous>, transform_indices = @transform_2, window_bounds = array<i64: 1, 128>}, {transform_indices = @transform_3, window_bounds = array<i64: 8, 128>}]} {
    %c0_i32 = arith.constant 0 : i32
    %0 = arith.cmpi eq, %arg1, %c0_i32 : i32
    %1 = arith.extui %0 : i1 to i32
    %c0_i32_0 = arith.constant 0 : i32
    %2 = arith.cmpi ne, %1, %c0_i32_0 : i32
    scf.if %2 {
      %cst_13 = arith.constant 0.000000e+00 : f32
      %17 = vector.broadcast %cst_13 : f32 to vector<8x32xf32>
      %c0_14 = arith.constant 0 : index
      %c0_15 = arith.constant 0 : index
      %18 = vector.load %arg6[%c0_14, %c0_15] : memref<8x32xf32, #tpu.memory_space<vmem>>, vector<8x32xf32>
      tpu.vector_store %arg6[%c0_14, %c0_15], %17 {strides = array<i32>} : memref<8x32xf32, #tpu.memory_space<vmem>>, vector<8x32xf32>,
      %cst_16 = arith.constant 0xFF800000 : f32
      %19 = vector.broadcast %cst_16 : f32 to vector<8x32xf32>
      %c0_17 = arith.constant 0 : index
      %c0_18 = arith.constant 0 : index
      %20 = vector.load %arg7[%c0_17, %c0_18] : memref<8x32xf32, #tpu.memory_space<vmem>>, vector<8x32xf32>
      tpu.vector_store %arg7[%c0_17, %c0_18], %19 {strides = array<i32>} : memref<8x32xf32, #tpu.memory_space<vmem>>, vector<8x32xf32>,
    } else {
    }
    %c0 = arith.constant 0 : index
    %c0_1 = arith.constant 0 : index
    %c0_2 = arith.constant 0 : index
    %3 = vector.load %arg2[%c0, %c0_1, %c0_2] : memref<8x16x32xbf16, #tpu.memory_space<vmem>>, vector<8x16x32xbf16>
    %c0_3 = arith.constant 0 : index
    %c0_4 = arith.constant 0 : index
    %4 = vector.load %arg6[%c0_3, %c0_4] : memref<8x32xf32, #tpu.memory_space<vmem>>, vector<8x32xf32>
    %5 = arith.extf %3 : vector<8x16x32xbf16> to vector<8x16x32xf32>
    %cst = arith.constant dense<0.000000e+00> : vector<8x32xf32>
    %6 = vector.multi_reduction <add>, %5, %cst [1] : vector<8x16x32xf32> to vector<8x32xf32>
    %7 = arith.addf %4, %6 : vector<8x32xf32>
    %c0_5 = arith.constant 0 : index
    %c0_6 = arith.constant 0 : index
    %8 = vector.load %arg6[%c0_5, %c0_6] : memref<8x32xf32, #tpu.memory_space<vmem>>, vector<8x32xf32>
    tpu.vector_store %arg6[%c0_5, %c0_6], %7 {strides = array<i32>} : memref<8x32xf32, #tpu.memory_space<vmem>>, vector<8x32xf32>,
    %c0_7 = arith.constant 0 : index
    %c0_8 = arith.constant 0 : index
    %9 = vector.load %arg7[%c0_7, %c0_8] : memref<8x32xf32, #tpu.memory_space<vmem>>, vector<8x32xf32>
    %cst_9 = arith.constant dense<0xFF80> : vector<8x32xbf16>
    %10 = vector.multi_reduction <maximumf>, %3, %cst_9 [1] : vector<8x16x32xbf16> to vector<8x32xbf16>
    %11 = arith.extf %10 : vector<8x32xbf16> to vector<8x32xf32>
    %12 = arith.maximumf %9, %11 : vector<8x32xf32>
    %c0_10 = arith.constant 0 : index
    %c0_11 = arith.constant 0 : index
    %13 = vector.load %arg7[%c0_10, %c0_11] : memref<8x32xf32, #tpu.memory_space<vmem>>, vector<8x32xf32>
    tpu.vector_store %arg7[%c0_10, %c0_11], %12 {strides = array<i32>} : memref<8x32xf32, #tpu.memory_space<vmem>>, vector<8x32xf32>,
    %c3_i32 = arith.constant 3 : i32
    %14 = arith.cmpi eq, %arg1, %c3_i32 : i32
    %15 = arith.extui %14 : i1 to i32
    %c0_i32_12 = arith.constant 0 : i32
    %16 = arith.cmpi ne, %15, %c0_i32_12 : i32
    scf.if %16 {
      %c0_13 = arith.constant 0 : index
      %c0_14 = arith.constant 0 : index
      %17 = vector.load %arg6[%c0_13, %c0_14] : memref<8x32xf32, #tpu.memory_space<vmem>>, vector<8x32xf32>
      %cst_15 = arith.constant 1.562500e-02 : f32
      %18 = vector.broadcast %cst_15 : f32 to vector<8x32xf32>
      %19 = arith.mulf %17, %18 : vector<8x32xf32>
      %c0_16 = arith.constant 0 : index
      %c0_17 = arith.constant 0 : index
      %20 = vector.load %arg7[%c0_16, %c0_17] : memref<8x32xf32, #tpu.memory_space<vmem>>, vector<8x32xf32>
      %c0_18 = arith.constant 0 : index
      %c0_19 = arith.constant 0 : index
      %21 = vector.load %arg3[%c0_18, %c0_19] : memref<64x128xf32, #tpu.memory_space<vmem>>, vector<32x128xf32>
      %cst_20 = arith.constant dense<0.000000e+00> : vector<8x128xf32>
      %22 = tpu.matmul %19, %21, %cst_20 {dimension_numbers = #tpu.dot_dimension_numbers<[1], [0], [0], [1], [0, 0, 1, 1], [], []>} : vector<8x32xf32>, vector<32x128xf32>, vector<8x128xf32> -> vector<8x128xf32>
      %c32 = arith.constant 32 : index
      %c0_21 = arith.constant 0 : index
      %23 = vector.load %arg3[%c32, %c0_21] : memref<64x128xf32, #tpu.memory_space<vmem>>, vector<32x128xf32>
      %cst_22 = arith.constant dense<0.000000e+00> : vector<8x128xf32>
      %24 = tpu.matmul %20, %23, %cst_22 {dimension_numbers = #tpu.dot_dimension_numbers<[1], [0], [0], [1], [0, 0, 1, 1], [], []>} : vector<8x32xf32>, vector<32x128xf32>, vector<8x128xf32> -> vector<8x128xf32>
      %25 = arith.addf %22, %24 : vector<8x128xf32>
      %c0_23 = arith.constant 0 : index
      %c0_24 = arith.constant 0 : index
      %26 = vector.load %arg4[%c0_23, %c0_24] : memref<1x128xf32, #tpu.memory_space<vmem>>, vector<1x128xf32>
      %27 = vector.broadcast %26 : vector<1x128xf32> to vector<8x128xf32>
      %28 = arith.addf %25, %27 : vector<8x128xf32>
      %c0_25 = arith.constant 0 : index
      %c0_26 = arith.constant 0 : index
      %29 = vector.load %arg5[%c0_25, %c0_26] : memref<8x128xf32, #tpu.memory_space<vmem>>, vector<8x128xf32>
      tpu.vector_store %arg5[%c0_25, %c0_26], %28 {strides = array<i32>} : memref<8x128xf32, #tpu.memory_space<vmem>>, vector<8x128xf32>,
    } else {
    }
    return
  }
  func.func @transform_0(%arg0: i32, %arg1: i32) -> (i32, i32, i32) {
    %c0_i32 = arith.constant 0 : i32
    %c0_i32_0 = arith.constant 0 : i32
    return %arg0, %arg1, %c0_i32 : i32, i32, i32
  }
  func.func @transform_1(%arg0: i32, %arg1: i32) -> (i32, i32) {
    %c0_i32 = arith.constant 0 : i32
    %c0_i32_0 = arith.constant 0 : i32
    %c0_i32_1 = arith.constant 0 : i32
    return %c0_i32, %c0_i32_0 : i32, i32
  }
  func.func @transform_2(%arg0: i32, %arg1: i32) -> (i32, i32) {
    %c0_i32 = arith.constant 0 : i32
    %c0_i32_0 = arith.constant 0 : i32
    %c0_i32_1 = arith.constant 0 : i32
    return %c0_i32, %c0_i32_0 : i32, i32
  }
  func.func @transform_3(%arg0: i32, %arg1: i32) -> (i32, i32) {
    %c0_i32 = arith.constant 0 : i32
    %c0_i32_0 = arith.constant 0 : i32
    return %arg0, %c0_i32 : i32, i32
  }
}

</mosaic_0001>

<llo_original>
// kernel: tpu_custom_call.1
$region0: #{tpu_custom_call.1}
  #allocation0 [shape = 'u32[]', space=smem, size = 0x4, offset = 0x4, fixed_abs, tag = 'smem constant byte address 0x4 - core index']
  #allocation1 [shape = 'u32[144,128]{1,0:T(1,128)}', space=vmem, size = 0x12000, scoped, tag = 'internal scratch']
  #allocation2 [shape = 'f32[8,32]{1,0:T(8,128)}', space=vmem, size = 0x1000, scoped, tag = 'scratch operand']
  #allocation3 [shape = 'f32[8,32]{1,0:T(8,128)}', space=vmem, size = 0x1000, scoped, tag = 'scratch operand']
  %s0 = inlined_call_operand.vmem [shape: bf16[16,64,32], index: 0, kind: input, shape index: {}]
  %s1 = inlined_call_operand.vmem [shape: f32[64,128], index: 1, kind: input, shape index: {}]
  %s2 = inlined_call_operand.vmem [shape: f32[1,128], index: 2, kind: input, shape index: {}]
  %s3 = inlined_call_operand.hbm [shape: f32[16,128], index: 3, kind: output, shape index: {}]
  %s4 = sld [smem:[#allocation0]]
  $region94: #{tpu_custom_call.1} parent=0
    _
  %s6 = ssub.s32 1, %s4
  %s7 = scalar_select 0, %s6, %s4
  $region1: #{tpu_custom_call.1} parent=0
    #allocation4 [shape = 'u8[65536]{0}', space=vmem, size = 0x10000, scoped, tag = 'input window, operand 0']
    #allocation5 [shape = 'u8[8192]{0}', space=vmem, size = 0x2000, scoped, tag = 'output window, operand 0']
    #allocation6 [shape = 's32[2]{0}', space=sflag, size = 0x8, scoped, tag = 'scoped memory for tpu_custom_call.1']
    %8 = vsyncpa [#allocation6], 0
    %s9 = scalar_lea.sflag [#allocation6], 1
    %10 = vsyncpa %s9, 0
    loop: start=0, step=1, limit=10
    $region2: #{tpu_custom_call.1} parent=1 // loop_pre_header
      _
    $region3: #{tpu_custom_call.1} parent=1 // loop_header
      %s12 = sphi 0, %s16
      %p13 = scmp.ge.s32.totalorder %s12, 10
      %s19 = sphi 0, %s31
      %s20 = sphi 0, %s27
      %s21 = sphi 0, %s19
      %s22 = sphi 0, %s20
      %s23 = sphi 0, %s21
      %s24 = sphi 0, %s22
      %s36 = sphi 0, %s38
      %s39 = sphi 0, %s36
      %s40 = sphi 0, %s39
      %s56 = sphi 0, %s40
      %s60 = sphi 0, %s60
      %s62 = sphi 0, %s60
      %s63 = sphi 0, %s62
      %s77 = sphi 0, %s63
      %s81 = sphi 0, %s81
      %s83 = sphi 0, %s81
      %s84 = sphi 0, %s83
      %s98 = sphi 0, %s84
      %s104 = sphi 0, %s106
      %s107 = sphi 0, %s104
      %s108 = sphi 0, %s107
      %s124 = sphi 0, %s108
    $region4: #{tpu_custom_call.1} parent=1 // loop_header_branch
      %15 = sbr.rel (%p13) target = $region8
    $region5: #{tpu_custom_call.1} parent=1 // loop_body
      %s17 = ssub.s32 %s12, 1
      %s18 = ssub.s32 %s12, 2
      %s25 = sadd.s32 1, %s20
      %p26 = scmp.ge.s32.totalorder %s25, 4
      %s27 = scalar_select %p26, 0, %s25
      %s28 = sadd.s32 1, %s19
      %s29 = scalar_select %p26, %s28, %s19
      %p30 = scmp.ge.s32.totalorder %s29, 2
      %s31 = scalar_select %p30, 0, %s29
      %s32 = ssub.s32 %s19, %s31
      %s33 = ssub.s32 %s20, %s27
      %s34 = sor.u32 %s32, %s33
      %p35 = scmp.eq.s32.totalorder %s34, 0
      %s37 = sadd.s32 %s36, 1
      %s38 = scalar_select %p35, %s36, %s37
      %p41 = pneg %p35
      %p42 = scmp.eq.s32.totalorder %s12, 7
      %p43 = por %p41, %p42
      %p44 = scmp.ne.s32.totalorder %s36, %s39
      %p45 = scmp.eq.s32.totalorder %s12, 0
      %p46 = por %p44, %p45
      %p47 = scmp.ne.s32.totalorder %s36, %s39
      %p48 = scmp.eq.s32.totalorder %s17, 7
      %p49 = por %p47, %p48
      %p50 = scmp.ne.s32.totalorder %s39, %s40
      %p51 = scmp.eq.s32.totalorder %s17, 0
      %p52 = por %p50, %p51
      %p53 = scmp.ne.s32.totalorder %s39, %s40
      %p54 = scmp.eq.s32.totalorder %s18, 7
      %p55 = por %p53, %p54
      %p57 = scmp.ne.s32.totalorder %s40, %s56
      %p58 = scmp.eq.s32.totalorder %s18, 0
      %p59 = por %p57, %p58
      %s61 = sadd.s32 %s60, 1
      %p64 = scmp.eq.s32.totalorder %s12, 7
      %p65 = scmp.ne.s32.totalorder %s60, %s62
      %p66 = scmp.eq.s32.totalorder %s12, 0
      %p67 = por %p65, %p66
      %p68 = scmp.ne.s32.totalorder %s60, %s62
      %p69 = scmp.eq.s32.totalorder %s17, 7
      %p70 = por %p68, %p69
      %p71 = scmp.ne.s32.totalorder %s62, %s63
      %p72 = scmp.eq.s32.totalorder %s17, 0
      %p73 = por %p71, %p72
      %p74 = scmp.ne.s32.totalorder %s62, %s63
      %p75 = scmp.eq.s32.totalorder %s18, 7
      %p76 = por %p74, %p75
      %p78 = scmp.ne.s32.totalorder %s63, %s77
      %p79 = scmp.eq.s32.totalorder %s18, 0
      %p80 = por %p78, %p79
      %s82 = sadd.s32 %s81, 1
      %p85 = scmp.eq.s32.totalorder %s12, 7
      %p86 = scmp.ne.s32.totalorder %s81, %s83
      %p87 = scmp.eq.s32.totalorder %s12, 0
      %p88 = por %p86, %p87
      %p89 = scmp.ne.s32.totalorder %s81, %s83
      %p90 = scmp.eq.s32.totalorder %s17, 7
      %p91 = por %p89, %p90
      %p92 = scmp.ne.s32.totalorder %s83, %s84
      %p93 = scmp.eq.s32.totalorder %s17, 0
      %p94 = por %p92, %p93
      %p95 = scmp.ne.s32.totalorder %s83, %s84
      %p96 = scmp.eq.s32.totalorder %s18, 7
      %p97 = por %p95, %p96
      %p99 = scmp.ne.s32.totalorder %s84, %s98
      %p100 = scmp.eq.s32.totalorder %s18, 0
      %p101 = por %p99, %p100
      %s102 = ssub.s32 %s19, %s31
      %p103 = scmp.eq.s32.totalorder %s102, 0
      %s105 = sadd.s32 %s104, 1
      %s106 = scalar_select %p103, %s104, %s105
      %p109 = pneg %p103
      %p110 = scmp.eq.s32.totalorder %s12, 7
      %p111 = por %p109, %p110
      %p112 = scmp.ne.s32.totalorder %s104, %s107
      %p113 = scmp.eq.s32.totalorder %s12, 0
      %p114 = por %p112, %p113
      %p115 = scmp.ne.s32.totalorder %s104, %s107
      %p116 = scmp.eq.s32.totalorder %s17, 7
      %p117 = por %p115, %p116
      %p118 = scmp.ne.s32.totalorder %s107, %s108
      %p119 = scmp.eq.s32.totalorder %s17, 0
      %p120 = por %p118, %p119
      %p121 = scmp.ne.s32.totalorder %s107, %s108
      %p122 = scmp.eq.s32.totalorder %s18, 7
      %p123 = por %p121, %p122
      %p125 = scmp.ne.s32.totalorder %s108, %s124
      %p126 = scmp.eq.s32.totalorder %s18, 0
      %p127 = por %p125, %p126
      %p128 = scmp.le.s32.totalorder 1, %s12
      %p129 = scmp.lt.s32.totalorder %s12, 9
      %p130 = pnand %p128, %p129
      %p131 = pneg %p130
      // Predicated region
      $region9: #{tpu_custom_call.1} parent=5 // pred_check
        _
      $region10: #{tpu_custom_call.1} parent=5 // pred_check_branch
        %133 = sbr.rel (%p130) target = $region12
      $region11: #{tpu_custom_call.1} parent=5 // pred_region
        %s134 = ssub.s32 %s12, 1
        // Predicated region
        $region13: #{tpu_custom_call.1} parent=11 // pred_check
          %p135 = pneg %p73
        $region14: #{tpu_custom_call.1} parent=11 // pred_check_branch
          %137 = sbr.rel (%p135) target = $region16
        $region15: #{tpu_custom_call.1} parent=11 // pred_region
          _
        $region16: #{tpu_custom_call.1} parent=11 // pred_fallthru
          _
        // Predicated region
        $region17: #{tpu_custom_call.1} parent=11 // pred_check
          %p138 = pneg %p94
        $region18: #{tpu_custom_call.1} parent=11 // pred_check_branch
          %140 = sbr.rel (%p138) target = $region20
        $region19: #{tpu_custom_call.1} parent=11 // pred_region
          _
        $region20: #{tpu_custom_call.1} parent=11 // pred_fallthru
          _
      $region12: #{tpu_custom_call.1} parent=5 // pred_fallthru
        _
      %p141 = scmp.lt.s32.totalorder %s12, 8
      // Predicated region
      $region21: #{tpu_custom_call.1} parent=5 // pred_check
        %p142 = pneg %p141
      $region22: #{tpu_custom_call.1} parent=5 // pred_check_branch
        %144 = sbr.rel (%p142) target = $region24
      $region23: #{tpu_custom_call.1} parent=5 // pred_region
        // Predicated region
        $region25: #{tpu_custom_call.1} parent=23 // pred_check
          %p145 = pneg %p46
        $region26: #{tpu_custom_call.1} parent=23 // pred_check_branch
          %147 = sbr.rel (%p145) target = $region28
        $region27: #{tpu_custom_call.1} parent=23 // pred_region
          %s148 = sand.u32 %s36, 1
          %s149 = sand.u32 %s36, 1
          %s150 = smul.addr %s149, 64
          %s151 = scalar_lea.vmem [#allocation4], %s150
          %s152 = smul.u32 8, %s19
          %s153 = smul.u32 2, %s20
          %s154 = smul.addr %s152, 8
          %s155 = sadd.s32 %s153, %s154
          %s156 = smul.addr %s155, 4
          %s157 = scalar_lea.vmem %s0, %s156
          // Predicated region
          $region29: #{tpu_custom_call.1} parent=27 // pred_check
            _
          $region30: #{tpu_custom_call.1} parent=27 // pred_check_branch
            %159 = sbr.rel (0) target = $region32
          $region31: #{tpu_custom_call.1} parent=27 // pred_region
            // Predicated region
            $region33: #{tpu_custom_call.1} parent=31 // pred_check
              _
            $region34: #{tpu_custom_call.1} parent=31 // pred_check_branch
              %161 = sbr.rel target = $region36
            $region35: #{tpu_custom_call.1} parent=31 // pred_region
              // Predicated region
              $region48: #{tpu_custom_call.1} parent=35 // pred_check
                _
              $region49: #{tpu_custom_call.1} parent=35 // pred_check_branch
                %207 = sbr.rel (0) target = $region51
              $region50: #{tpu_custom_call.1} parent=35 // pred_region
                loop: start=0, step=1, limit=1
                $region52: #{tpu_custom_call.1} parent=50 // loop_pre_header
                  _
                $region53: #{tpu_custom_call.1} parent=50 // loop_header
                  %s209 = sphi 0, %s213
                  %p210 = scmp.ge.s32.totalorder %s209, 1
                  %s214 = sphi %s157, %s157
                  %s215 = sphi %s151, %s151
                $region54: #{tpu_custom_call.1} parent=50 // loop_header_branch
                  %212 = sbr.rel (%p210) target = $region58
                $region55: #{tpu_custom_call.1} parent=50 // loop_body
                  _
                $region56: #{tpu_custom_call.1} parent=50 // loop_footer
                  %s213 = sadd.s32 1, %s209
                $region57: #{tpu_custom_call.1} parent=50 // loop_footer_branch
                  %208 = sbr.rel target = $region53
                $region58: #{tpu_custom_call.1} parent=50 // loop_exit
                  _
                %s217 = ssub.s32 16, 1
                loop: start=0, step=1, limit=1
                $region59: #{tpu_custom_call.1} parent=50 // loop_pre_header
                  _
                $region60: #{tpu_custom_call.1} parent=50 // loop_header
                  %s219 = sphi 0, %s223
                  %p220 = scmp.ge.s32.totalorder %s219, 1
                  %s224 = sphi %s157, %s157
                  %s225 = sphi %s151, %s151
                $region61: #{tpu_custom_call.1} parent=50 // loop_header_branch
                  %222 = sbr.rel (%p220) target = $region65
                $region62: #{tpu_custom_call.1} parent=50 // loop_body
                  %v226 = vld [vmem:[%s224] sm:%s217]
                  %227 = vst [vmem:[%s225] sm:%s217] %v226
                  %v228 = vld [vmem:[%s224 + $0x4] sm:%s217]
                  %229 = vst [vmem:[%s225 + $0x4] sm:%s217] %v228
                  %v230 = vld [vmem:[%s224 + $0x20] sm:%s217]
                  %231 = vst [vmem:[%s225 + $0x8] sm:%s217] %v230
                  %v232 = vld [vmem:[%s224 + $0x24] sm:%s217]
                  %233 = vst [vmem:[%s225 + $0xc] sm:%s217] %v232
                  %v234 = vld [vmem:[%s224 + $0x40] sm:%s217]
                  %235 = vst [vmem:[%s225 + $0x10] sm:%s217] %v234
                  %v236 = vld [vmem:[%s224 + $0x44] sm:%s217]
                  %237 = vst [vmem:[%s225 + $0x14] sm:%s217] %v236
                  %v238 = vld [vmem:[%s224 + $0x60] sm:%s217]
                  %239 = vst [vmem:[%s225 + $0x18] sm:%s217] %v238
                  %v240 = vld [vmem:[%s224 + $0x64] sm:%s217]
                  %241 = vst [vmem:[%s225 + $0x1c] sm:%s217] %v240
                  %v242 = vld [vmem:[%s224 + $0x80] sm:%s217]
                  %243 = vst [vmem:[%s225 + $0x20] sm:%s217] %v242
                  %v244 = vld [vmem:[%s224 + $0x84] sm:%s217]
                  %245 = vst [vmem:[%s225 + $0x24] sm:%s217] %v244
                  %v246 = vld [vmem:[%s224 + $0xa0] sm:%s217]
                  %247 = vst [vmem:[%s225 + $0x28] sm:%s217] %v246
                  %v248 = vld [vmem:[%s224 + $0xa4] sm:%s217]
                  %249 = vst [vmem:[%s225 + $0x2c] sm:%s217] %v248
                  %v250 = vld [vmem:[%s224 + $0xc0] sm:%s217]
                  %251 = vst [vmem:[%s225 + $0x30] sm:%s217] %v250
                  %v252 = vld [vmem:[%s224 + $0xc4] sm:%s217]
                  %253 = vst [vmem:[%s225 + $0x34] sm:%s217] %v252
                  %v254 = vld [vmem:[%s224 + $0xe0] sm:%s217]
                  %255 = vst [vmem:[%s225 + $0x38] sm:%s217] %v254
                  %v256 = vld [vmem:[%s224 + $0xe4] sm:%s217]
                  %257 = vst [vmem:[%s225 + $0x3c] sm:%s217] %v256
                $region63: #{tpu_custom_call.1} parent=50 // loop_footer
                  %s223 = sadd.s32 1, %s219
                $region64: #{tpu_custom_call.1} parent=50 // loop_footer_branch
                  %218 = sbr.rel target = $region60
                $region65: #{tpu_custom_call.1} parent=50 // loop_exit
                  _
              $region51: #{tpu_custom_call.1} parent=35 // pred_fallthru
                _
            $region36: #{tpu_custom_call.1} parent=31 // pred_fallthru
              _
            // Predicated region
            $region37: #{tpu_custom_call.1} parent=31 // pred_check
              _
            $region38: #{tpu_custom_call.1} parent=31 // pred_check_branch
              %163 = sbr.rel (0) target = $region40
            $region39: #{tpu_custom_call.1} parent=31 // pred_region
              %s165 = ssub.s32 16, 1
              loop: start=0, step=1, limit=1
              $region41: #{tpu_custom_call.1} parent=39 // loop_pre_header
                _
              $region42: #{tpu_custom_call.1} parent=39 // loop_header
                %s167 = sphi 0, %s171
                %p168 = scmp.ge.s32.totalorder %s167, 1
                %s172 = sphi %s157, %s157
                %s173 = sphi %s151, %s151
              $region43: #{tpu_custom_call.1} parent=39 // loop_header_branch
                %170 = sbr.rel (%p168) target = $region47
              $region44: #{tpu_custom_call.1} parent=39 // loop_body
                %v174 = vld [vmem:[%s172] sm:%s165]
                %175 = vst [vmem:[%s173] sm:%s165] %v174
                %v176 = vld [vmem:[%s172 + $0x4] sm:%s165]
                %177 = vst [vmem:[%s173 + $0x4] sm:%s165] %v176
                %v178 = vld [vmem:[%s172 + $0x20] sm:%s165]
                %179 = vst [vmem:[%s173 + $0x8] sm:%s165] %v178
                %v180 = vld [vmem:[%s172 + $0x24] sm:%s165]
                %181 = vst [vmem:[%s173 + $0xc] sm:%s165] %v180
                %v182 = vld [vmem:[%s172 + $0x40] sm:%s165]
                %183 = vst [vmem:[%s173 + $0x10] sm:%s165] %v182
                %v184 = vld [vmem:[%s172 + $0x44] sm:%s165]
                %185 = vst [vmem:[%s173 + $0x14] sm:%s165] %v184
                %v186 = vld [vmem:[%s172 + $0x60] sm:%s165]
                %187 = vst [vmem:[%s173 + $0x18] sm:%s165] %v186
                %v188 = vld [vmem:[%s172 + $0x64] sm:%s165]
                %189 = vst [vmem:[%s173 + $0x1c] sm:%s165] %v188
                %v190 = vld [vmem:[%s172 + $0x80] sm:%s165]
                %191 = vst [vmem:[%s173 + $0x20] sm:%s165] %v190
                %v192 = vld [vmem:[%s172 + $0x84] sm:%s165]
                %193 = vst [vmem:[%s173 + $0x24] sm:%s165] %v192
                %v194 = vld [vmem:[%s172 + $0xa0] sm:%s165]
                %195 = vst [vmem:[%s173 + $0x28] sm:%s165] %v194
                %v196 = vld [vmem:[%s172 + $0xa4] sm:%s165]
                %197 = vst [vmem:[%s173 + $0x2c] sm:%s165] %v196
                %v198 = vld [vmem:[%s172 + $0xc0] sm:%s165]
                %199 = vst [vmem:[%s173 + $0x30] sm:%s165] %v198
                %v200 = vld [vmem:[%s172 + $0xc4] sm:%s165]
                %201 = vst [vmem:[%s173 + $0x34] sm:%s165] %v200
                %v202 = vld [vmem:[%s172 + $0xe0] sm:%s165]
                %203 = vst [vmem:[%s173 + $0x38] sm:%s165] %v202
                %v204 = vld [vmem:[%s172 + $0xe4] sm:%s165]
                %205 = vst [vmem:[%s173 + $0x3c] sm:%s165] %v204
              $region45: #{tpu_custom_call.1} parent=39 // loop_footer
                %s171 = sadd.s32 1, %s167
              $region46: #{tpu_custom_call.1} parent=39 // loop_footer_branch
                %166 = sbr.rel target = $region42
              $region47: #{tpu_custom_call.1} parent=39 // loop_exit
                _
            $region40: #{tpu_custom_call.1} parent=31 // pred_fallthru
              _
          $region32: #{tpu_custom_call.1} parent=27 // pred_fallthru
            _
          %258 = vnop
        $region28: #{tpu_custom_call.1} parent=23 // pred_fallthru
          _
      $region24: #{tpu_custom_call.1} parent=5 // pred_fallthru
        _
      %p259 = scmp.le.s32.totalorder 1, %s12
      %p260 = scmp.lt.s32.totalorder %s12, 9
      %p261 = pnand %p259, %p260
      %p262 = pneg %p261
      // Predicated region
      $region66: #{tpu_custom_call.1} parent=5 // pred_check
        _
      $region67: #{tpu_custom_call.1} parent=5 // pred_check_branch
        %264 = sbr.rel (%p261) target = $region69
      $region68: #{tpu_custom_call.1} parent=5 // pred_region
        %s265 = ssub.s32 %s12, 1
        %s266 = sand.u32 %s39, 1
        %s267 = sand.u32 %s39, 1
        %s268 = smul.addr %s267, 64
        %s269 = scalar_lea.vmem [#allocation4], %s268
        // Predicated region
        $region70: #{tpu_custom_call.1} parent=68 // pred_check
          %p270 = pneg %p52
        $region71: #{tpu_custom_call.1} parent=68 // pred_check_branch
          %272 = sbr.rel (%p270) target = $region73
        $region72: #{tpu_custom_call.1} parent=68 // pred_region
          _
        $region73: #{tpu_custom_call.1} parent=68 // pred_fallthru
          _
        %s273 = sand.u32 %s39, 1
        %s274 = sand.u32 %s39, 1
        %s275 = smul.addr %s274, 64
        %s276 = scalar_lea.vmem [#allocation4], %s275
        %p277 = pneg %p52
        %p278 = pneg %p49
        %p279 = pneg %p73
        %p280 = pneg %p70
        %p281 = pneg %p94
        %p282 = pneg %p91
        %p283 = pneg %p120
        %p284 = pneg %p117
        %s285 = sand.u32 %s107, 1
        %s286 = scalar_lea.sflag [#allocation6], %s285
        %s287 = sand.u32 %s107, 1
        %s288 = smul.addr %s287, 8
        %s289 = scalar_lea.vmem [#allocation5], %s288
        %s290 = smul.u32 8, %s21
        %s291 = smul.u32 2, %s22
        %p293 = scmp.eq.s32.totalorder %s22, 0
        // Predicated region
        $region74: #{tpu_custom_call.1} parent=68 // pred_check
          %p294 = pneg %p293
        $region75: #{tpu_custom_call.1} parent=68 // pred_check_branch
          %296 = sbr.rel (%p294) target = $region77
        $region76: #{tpu_custom_call.1} parent=68 // pred_region
          %vm297 = vcmask 261120
          %298 = vst.msk [vmem:[#allocation2] sm:$0xff] %vm297, 0.0
          %299 = vst.msk [vmem:[#allocation3] sm:$0xff] %vm297, -inf
        $region77: #{tpu_custom_call.1} parent=68 // pred_fallthru
          _
        %v300 = vld [vmem:[%s269] sm:$0xf]
        %v301 = vld [vmem:[%s269 + $0x4] sm:$0xf]
        %v302 = vld [vmem:[%s269 + $0x8] sm:$0xf]
        %v303 = vld [vmem:[%s269 + $0xc] sm:$0xf]
        %v304 = vld [vmem:[%s269 + $0x10] sm:$0xf]
        %v305 = vld [vmem:[%s269 + $0x14] sm:$0xf]
        %v306 = vld [vmem:[%s269 + $0x18] sm:$0xf]
        %v307 = vld [vmem:[%s269 + $0x1c] sm:$0xf]
        %v308 = vld [vmem:[%s269 + $0x20] sm:$0xf]
        %v309 = vld [vmem:[%s269 + $0x24] sm:$0xf]
        %v310 = vld [vmem:[%s269 + $0x28] sm:$0xf]
        %v311 = vld [vmem:[%s269 + $0x2c] sm:$0xf]
        %v312 = vld [vmem:[%s269 + $0x30] sm:$0xf]
        %v313 = vld [vmem:[%s269 + $0x34] sm:$0xf]
        %v314 = vld [vmem:[%s269 + $0x38] sm:$0xf]
        %v315 = vld [vmem:[%s269 + $0x3c] sm:$0xf]
        %v316 = vld [vmem:[#allocation2] sm:$0xff]
        %v317 = vunpack.c.l.bf16 %v300
        %v318 = vunpack.c.l.bf16 %v301
        %v319 = vunpack.c.l.bf16 %v302
        %v320 = vunpack.c.l.bf16 %v303
        %v321 = vunpack.c.l.bf16 %v304
        %v322 = vunpack.c.l.bf16 %v305
        %v323 = vunpack.c.l.bf16 %v306
        %v324 = vunpack.c.l.bf16 %v307
        %v325 = vunpack.c.l.bf16 %v308
        %v326 = vunpack.c.l.bf16 %v309
        %v327 = vunpack.c.l.bf16 %v310
        %v328 = vunpack.c.l.bf16 %v311
        %v329 = vunpack.c.l.bf16 %v312
        %v330 = vunpack.c.l.bf16 %v313
        %v331 = vunpack.c.l.bf16 %v314
        %v332 = vunpack.c.l.bf16 %v315
        %vm333 = vcmask 261120
        %v334 = vsel %vm333, %v317, 0.0
        %v335 = vsel %vm333, %v318, 0.0
        %v336 = vadd.f32 %v334, %v335
        %v337 = vrot.slane %v336, 4
        %v338 = vadd.f32 %v336, %v337
        %v339 = vrot.slane %v338, 2
        %v340 = vadd.f32 %v338, %v339
        %v341 = vrot.slane %v340, 1
        %v342 = vadd.f32 %v340, %v341
        %v343 = vsel %vm333, %v319, 0.0
        %v344 = vsel %vm333, %v320, 0.0
        %v345 = vadd.f32 %v343, %v344
        %v346 = vrot.slane %v345, 4
        %v347 = vadd.f32 %v345, %v346
        %v348 = vrot.slane %v347, 2
        %v349 = vadd.f32 %v347, %v348
        %v350 = vrot.slane %v349, 1
        %v351 = vadd.f32 %v349, %v350
        %v352 = vsel %vm333, %v321, 0.0
        %v353 = vsel %vm333, %v322, 0.0
        %v354 = vadd.f32 %v352, %v353
        %v355 = vrot.slane %v354, 4
        %v356 = vadd.f32 %v354, %v355
        %v357 = vrot.slane %v356, 2
        %v358 = vadd.f32 %v356, %v357
        %v359 = vrot.slane %v358, 1
        %v360 = vadd.f32 %v358, %v359
        %v361 = vsel %vm333, %v323, 0.0
        %v362 = vsel %vm333, %v324, 0.0
        %v363 = vadd.f32 %v361, %v362
        %v364 = vrot.slane %v363, 4
        %v365 = vadd.f32 %v363, %v364
        %v366 = vrot.slane %v365, 2
        %v367 = vadd.f32 %v365, %v366
        %v368 = vrot.slane %v367, 1
        %v369 = vadd.f32 %v367, %v368
        %v370 = vsel %vm333, %v325, 0.0
        %v371 = vsel %vm333, %v326, 0.0
        %v372 = vadd.f32 %v370, %v371
        %v373 = vrot.slane %v372, 4
        %v374 = vadd.f32 %v372, %v373
        %v375 = vrot.slane %v374, 2
        %v376 = vadd.f32 %v374, %v375
        %v377 = vrot.slane %v376, 1
        %v378 = vadd.f32 %v376, %v377
        %v379 = vsel %vm333, %v327, 0.0
        %v380 = vsel %vm333, %v328, 0.0
        %v381 = vadd.f32 %v379, %v380
        %v382 = vrot.slane %v381, 4
        %v383 = vadd.f32 %v381, %v382
        %v384 = vrot.slane %v383, 2
        %v385 = vadd.f32 %v383, %v384
        %v386 = vrot.slane %v385, 1
        %v387 = vadd.f32 %v385, %v386
        %v388 = vsel %vm333, %v329, 0.0
        %v389 = vsel %vm333, %v330, 0.0
        %v390 = vadd.f32 %v388, %v389
        %v391 = vrot.slane %v390, 4
        %v392 = vadd.f32 %v390, %v391
        %v393 = vrot.slane %v392, 2
        %v394 = vadd.f32 %v392, %v393
        %v395 = vrot.slane %v394, 1
        %v396 = vadd.f32 %v394, %v395
        %v397 = vsel %vm333, %v331, 0.0
        %v398 = vsel %vm333, %v332, 0.0
        %v399 = vadd.f32 %v397, %v398
        %v400 = vrot.slane %v399, 4
        %v401 = vadd.f32 %v399, %v400
        %v402 = vrot.slane %v401, 2
        %v403 = vadd.f32 %v401, %v402
        %v404 = vrot.slane %v403, 1
        %v405 = vadd.f32 %v403, %v404
        %vm414 = vcmask 1041409
        %v415 = vsel %vm414, %v351, %v342
        %vm416 = vcmask 1042434
        %v417 = vsel %vm416, %v360, %v415
        %vm418 = vcmask 1043459
        %v419 = vsel %vm418, %v369, %v417
        %vm420 = vcmask 1044484
        %v421 = vsel %vm420, %v378, %v419
        %vm422 = vcmask 1045509
        %v423 = vsel %vm422, %v387, %v421
        %vm424 = vcmask 1046534
        %v425 = vsel %vm424, %v396, %v423
        %vm426 = vcmask 1047559
        %v427 = vsel %vm426, %v405, %v425
        %v429 = vadd.f32 %v316, %v427
        %430 = vst.msk [vmem:[#allocation2] sm:$0xff] %vm333, %v429
        %v431 = vld [vmem:[#allocation3] sm:$0xff]
        %v448 = vunpack.c.l.b16 %v300
        %v449 = vunpack.c.l.b16 %v301
        %v450 = vunpack.c.l.b16 %v302
        %v451 = vunpack.c.l.b16 %v303
        %v452 = vunpack.c.l.b16 %v304
        %v453 = vunpack.c.l.b16 %v305
        %v454 = vunpack.c.l.b16 %v306
        %v455 = vunpack.c.l.b16 %v307
        %v456 = vunpack.c.l.b16 %v308
        %v457 = vunpack.c.l.b16 %v309
        %v458 = vunpack.c.l.b16 %v310
        %v459 = vunpack.c.l.b16 %v311
        %v460 = vunpack.c.l.b16 %v312
        %v461 = vunpack.c.l.b16 %v313
        %v462 = vunpack.c.l.b16 %v314
        %v463 = vunpack.c.l.b16 %v315
        %v464 = vpack.c.b16 %v449, %v448
        %v465 = vpack.c.b16 %v451, %v450
        %v466 = vpack.c.b16 %v453, %v452
        %v467 = vpack.c.b16 %v455, %v454
        %v468 = vpack.c.b16 %v457, %v456
        %v469 = vpack.c.b16 %v459, %v458
        %v470 = vpack.c.b16 %v461, %v460
        %v471 = vpack.c.b16 %v463, %v462
        %v474 = vsel %vm333, %v464, 4286644096
        %v476 = vunpack.i.l.bf16 %v474
        %v477 = vunpack.i.h.bf16 %v474
        %v478 = vmax.f32 %v476, %v477
        %v479 = vrot.slane %v478, 4
        %v480 = vmax.f32 %v478, %v479
        %v481 = vrot.slane %v480, 2
        %v482 = vmax.f32 %v480, %v481
        %v483 = vrot.slane %v482, 1
        %v484 = vmax.f32 %v482, %v483
        %v485 = vpack.i.bf16 %v484, %v484
        %v487 = vsel %vm333, %v465, 4286644096
        %v489 = vunpack.i.l.bf16 %v487
        %v490 = vunpack.i.h.bf16 %v487
        %v491 = vmax.f32 %v489, %v490
        %v492 = vrot.slane %v491, 4
        %v493 = vmax.f32 %v491, %v492
        %v494 = vrot.slane %v493, 2
        %v495 = vmax.f32 %v493, %v494
        %v496 = vrot.slane %v495, 1
        %v497 = vmax.f32 %v495, %v496
        %v498 = vpack.i.bf16 %v497, %v497
        %v500 = vsel %vm333, %v466, 4286644096
        %v502 = vunpack.i.l.bf16 %v500
        %v503 = vunpack.i.h.bf16 %v500
        %v504 = vmax.f32 %v502, %v503
        %v505 = vrot.slane %v504, 4
        %v506 = vmax.f32 %v504, %v505
        %v507 = vrot.slane %v506, 2
        %v508 = vmax.f32 %v506, %v507
        %v509 = vrot.slane %v508, 1
        %v510 = vmax.f32 %v508, %v509
        %v511 = vpack.i.bf16 %v510, %v510
        %v513 = vsel %vm333, %v467, 4286644096
        %v515 = vunpack.i.l.bf16 %v513
        %v516 = vunpack.i.h.bf16 %v513
        %v517 = vmax.f32 %v515, %v516
        %v518 = vrot.slane %v517, 4
        %v519 = vmax.f32 %v517, %v518
        %v520 = vrot.slane %v519, 2
        %v521 = vmax.f32 %v519, %v520
        %v522 = vrot.slane %v521, 1
        %v523 = vmax.f32 %v521, %v522
        %v524 = vpack.i.bf16 %v523, %v523
        %v526 = vsel %vm333, %v468, 4286644096
        %v528 = vunpack.i.l.bf16 %v526
        %v529 = vunpack.i.h.bf16 %v526
        %v530 = vmax.f32 %v528, %v529
        %v531 = vrot.slane %v530, 4
        %v532 = vmax.f32 %v530, %v531
        %v533 = vrot.slane %v532, 2
        %v534 = vmax.f32 %v532, %v533
        %v535 = vrot.slane %v534, 1
        %v536 = vmax.f32 %v534, %v535
        %v537 = vpack.i.bf16 %v536, %v536
        %v539 = vsel %vm333, %v469, 4286644096
        %v541 = vunpack.i.l.bf16 %v539
        %v542 = vunpack.i.h.bf16 %v539
        %v543 = vmax.f32 %v541, %v542
        %v544 = vrot.slane %v543, 4
        %v545 = vmax.f32 %v543, %v544
        %v546 = vrot.slane %v545, 2
        %v547 = vmax.f32 %v545, %v546
        %v548 = vrot.slane %v547, 1
        %v549 = vmax.f32 %v547, %v548
        %v550 = vpack.i.bf16 %v549, %v549
        %v552 = vsel %vm333, %v470, 4286644096
        %v554 = vunpack.i.l.bf16 %v552
        %v555 = vunpack.i.h.bf16 %v552
        %v556 = vmax.f32 %v554, %v555
        %v557 = vrot.slane %v556, 4
        %v558 = vmax.f32 %v556, %v557
        %v559 = vrot.slane %v558, 2
        %v560 = vmax.f32 %v558, %v559
        %v561 = vrot.slane %v560, 1
        %v562 = vmax.f32 %v560, %v561
        %v563 = vpack.i.bf16 %v562, %v562
        %v565 = vsel %vm333, %v471, 4286644096
        %v567 = vunpack.i.l.bf16 %v565
        %v568 = vunpack.i.h.bf16 %v565
        %v569 = vmax.f32 %v567, %v568
        %v570 = vrot.slane %v569, 4
        %v571 = vmax.f32 %v569, %v570
        %v572 = vrot.slane %v571, 2
        %v573 = vmax.f32 %v571, %v572
        %v574 = vrot.slane %v573, 1
        %v575 = vmax.f32 %v573, %v574
        %v576 = vpack.i.bf16 %v575, %v575
        %v577 = vunpack.c.l.bf16 %v485
        %v578 = vunpack.c.l.bf16 %v498
        %v579 = vunpack.c.l.bf16 %v511
        %v580 = vunpack.c.l.bf16 %v524
        %v581 = vunpack.c.l.bf16 %v537
        %v582 = vunpack.c.l.bf16 %v550
        %v583 = vunpack.c.l.bf16 %v563
        %v584 = vunpack.c.l.bf16 %v576
        %v593 = vsel %vm414, %v578, %v577
        %v594 = vsel %vm416, %v579, %v593
        %v595 = vsel %vm418, %v580, %v594
        %v596 = vsel %vm420, %v581, %v595
        %v597 = vsel %vm422, %v582, %v596
        %v598 = vsel %vm424, %v583, %v597
        %v599 = vsel %vm426, %v584, %v598
        %v601 = vmax.f32 %v431, %v599
        %602 = vst.msk [vmem:[#allocation3] sm:$0xff] %vm333, %v601
        %p603 = scmp.eq.s32.totalorder %s22, 3
        // Predicated region
        $region78: #{tpu_custom_call.1} parent=68 // pred_check
          %p604 = pneg %p603
        $region79: #{tpu_custom_call.1} parent=68 // pred_check_branch
          %606 = sbr.rel (%p604) target = $region81
        $region80: #{tpu_custom_call.1} parent=68 // pred_region
          %v607 = vld [vmem:[#allocation2] sm:$0xff]
          %v608 = vmul.f32 %v607, 0.015625
          %v609 = vld [vmem:[#allocation3] sm:$0xff]
          %v610 = vld [vmem:[%s1] sm:$0xff]
          %v611 = vld [vmem:[%s1 + $0x8] sm:$0xff]
          %v612 = vld [vmem:[%s1 + $0x10] sm:$0xff]
          %v613 = vld [vmem:[%s1 + $0x18] sm:$0xff]
          %v614 = vld [vmem:[%s1 + $0x20] sm:$0xff]
          %v615 = vld [vmem:[%s1 + $0x28] sm:$0xff]
          %v616 = vld [vmem:[%s1 + $0x30] sm:$0xff]
          %v617 = vld [vmem:[%s1 + $0x38] sm:$0xff]
          %v619 = vsel %vm333, %v609, 0
          %621 = vmatprep.subr.mxu0 0.0
          %622 = vmatpush1.msra.mxu0 0.0
          %623 = vmatprep.subr.mxu0 0.0
          %624 = vmatpush1.msra.mxu0 0.0
          %625 = vmatprep.subr.mxu0 0.0
          %626 = vmatpush1.msra.mxu0 0.0
          %627 = vmatprep.subr.mxu0 0.0
          %628 = vmatpush1.msra.mxu0 0.0
          %629 = vmatprep.subr.mxu0 0.0
          %630 = vmatpush1.msra.mxu0 0.0
          %631 = vmatprep.subr.mxu0 0.0
          %632 = vmatpush1.msra.mxu0 0.0
          %633 = vmatprep.subr.mxu0 0.0
          %634 = vmatpush1.msra.mxu0 0.0
          %635 = vmatprep.subr.mxu0 0.0
          %636 = vmatpush1.msra.mxu0 0.0
          %637 = vmatprep.subr.mxu0 0.0
          %638 = vmatpush1.msra.mxu0 0.0
          %639 = vmatprep.subr.mxu0 0.0
          %640 = vmatpush1.msra.mxu0 0.0
          %641 = vmatprep.subr.mxu0 0.0
          %642 = vmatpush1.msra.mxu0 0.0
          %643 = vmatprep.subr.mxu0 0.0
          %644 = vmatpush1.msra.mxu0 0.0
          %645 = vmatprep.subr.mxu0 0.0
          %646 = vmatpush1.msra.mxu0 %v617
          %647 = vmatprep.subr.mxu0 0.0
          %648 = vmatpush1.msra.mxu0 %v616
          %649 = vmatprep.subr.mxu0 0.0
          %650 = vmatpush1.msra.mxu0 %v615
          %651 = vmatprep.subr.mxu0 0.0
          %652 = vmatpush1.msra.mxu0 %v614
          %653 = vmatprep.subr.mxu0 0.0
          %654 = vmatpush2.msra.mxu0 0.0
          %655 = vmatprep.subr.mxu0 0.0
          %656 = vmatpush2.msra.mxu0 0.0
          %657 = vmatprep.subr.mxu0 0.0
          %658 = vmatpush2.msra.mxu0 0.0
          %659 = vmatprep.subr.mxu0 0.0
          %660 = vmatpush2.msra.mxu0 0.0
          %661 = vmatprep.subr.mxu0 0.0
          %662 = vmatpush2.msra.mxu0 0.0
          %663 = vmatprep.subr.mxu0 0.0
          %664 = vmatpush2.msra.mxu0 0.0
          %665 = vmatprep.subr.mxu0 0.0
          %666 = vmatpush2.msra.mxu0 0.0
          %667 = vmatprep.subr.mxu0 0.0
          %668 = vmatpush2.msra.mxu0 0.0
          %669 = vmatprep.subr.mxu0 0.0
          %670 = vmatpush2.msra.mxu0 0.0
          %671 = vmatprep.subr.mxu0 0.0
          %672 = vmatpush2.msra.mxu0 0.0
          %673 = vmatprep.subr.mxu0 0.0
          %674 = vmatpush2.msra.mxu0 0.0
          %675 = vmatprep.subr.mxu0 0.0
          %676 = vmatpush2.msra.mxu0 0.0
          %677 = vmatprep.subr.mxu0 0.0
          %678 = vmatpush2.msra.mxu0 0.0
          %679 = vmatprep.subr.mxu0 0.0
          %680 = vmatpush2.msra.mxu0 0.0
          %681 = vmatprep.subr.mxu0 0.0
          %682 = vmatpush2.msra.mxu0 0.0
          %683 = vmatprep.subr.mxu0 0.0
          %684 = vmatpush2.msra.mxu0 0.0
          %685 = vmatprep.mubr.f32.mxu0 0.0
          %686 = vmatmul.mubr.f32.gmra.mxu0 %v619
          %v687 = vpop.f32.mrf.mxu0
          %v688 = vadd.f32 0.0, %v687
          %v689 = vpop.f32.mrf.mxu0
          %690 = vdwg.mxu0
          %v692 = vsel %vm333, %v608, 0
          %694 = vmatprep.subr.mxu0 0.0
          %695 = vmatpush1.msra.mxu0 0.0
          %696 = vmatprep.subr.mxu0 0.0
          %697 = vmatpush1.msra.mxu0 0.0
          %698 = vmatprep.subr.mxu0 0.0
          %699 = vmatpush1.msra.mxu0 0.0
          %700 = vmatprep.subr.mxu0 0.0
          %701 = vmatpush1.msra.mxu0 0.0
          %702 = vmatprep.subr.mxu0 0.0
          %703 = vmatpush1.msra.mxu0 0.0
          %704 = vmatprep.subr.mxu0 0.0
          %705 = vmatpush1.msra.mxu0 0.0
          %706 = vmatprep.subr.mxu0 0.0
          %707 = vmatpush1.msra.mxu0 0.0
          %708 = vmatprep.subr.mxu0 0.0
          %709 = vmatpush1.msra.mxu0 0.0
          %710 = vmatprep.subr.mxu0 0.0
          %711 = vmatpush1.msra.mxu0 0.0
          %712 = vmatprep.subr.mxu0 0.0
          %713 = vmatpush1.msra.mxu0 0.0
          %714 = vmatprep.subr.mxu0 0.0
          %715 = vmatpush1.msra.mxu0 0.0
          %716 = vmatprep.subr.mxu0 0.0
          %717 = vmatpush1.msra.mxu0 0.0
          %718 = vmatprep.subr.mxu0 0.0
          %719 = vmatpush1.msra.mxu0 %v613
          %720 = vmatprep.subr.mxu0 0.0
          %721 = vmatpush1.msra.mxu0 %v612
          %722 = vmatprep.subr.mxu0 0.0
          %723 = vmatpush1.msra.mxu0 %v611
          %724 = vmatprep.subr.mxu0 0.0
          %725 = vmatpush1.msra.mxu0 %v610
          %726 = vmatprep.subr.mxu0 0.0
          %727 = vmatpush2.msra.mxu0 0.0
          %728 = vmatprep.subr.mxu0 0.0
          %729 = vmatpush2.msra.mxu0 0.0
          %730 = vmatprep.subr.mxu0 0.0
          %731 = vmatpush2.msra.mxu0 0.0
          %732 = vmatprep.subr.mxu0 0.0
          %733 = vmatpush2.msra.mxu0 0.0
          %734 = vmatprep.subr.mxu0 0.0
          %735 = vmatpush2.msra.mxu0 0.0
          %736 = vmatprep.subr.mxu0 0.0
          %737 = vmatpush2.msra.mxu0 0.0
          %738 = vmatprep.subr.mxu0 0.0
          %739 = vmatpush2.msra.mxu0 0.0
          %740 = vmatprep.subr.mxu0 0.0
          %741 = vmatpush2.msra.mxu0 0.0
          %742 = vmatprep.subr.mxu0 0.0
          %743 = vmatpush2.msra.mxu0 0.0
          %744 = vmatprep.subr.mxu0 0.0
          %745 = vmatpush2.msra.mxu0 0.0
          %746 = vmatprep.subr.mxu0 0.0
          %747 = vmatpush2.msra.mxu0 0.0
          %748 = vmatprep.subr.mxu0 0.0
          %749 = vmatpush2.msra.mxu0 0.0
          %750 = vmatprep.subr.mxu0 0.0
          %751 = vmatpush2.msra.mxu0 0.0
          %752 = vmatprep.subr.mxu0 0.0
          %753 = vmatpush2.msra.mxu0 0.0
          %754 = vmatprep.subr.mxu0 0.0
          %755 = vmatpush2.msra.mxu0 0.0
          %756 = vmatprep.subr.mxu0 0.0
          %757 = vmatpush2.msra.mxu0 0.0
          %758 = vmatprep.mubr.f32.mxu0 0.0
          %759 = vmatmul.mubr.f32.gmra.mxu0 %v692
          %v760 = vpop.f32.mrf.mxu0
          %v761 = vadd.f32 %v688, %v760
          %v762 = vpop.f32.mrf.mxu0
          %763 = vdwg.mxu0
          %v764 = vld [vmem:[%s2] sm:$0x1]
          %v766 = vlaneseq
          %v767 = vshrl.u32 %v766, 7
          %v768 = vsub.s32 0, %v767
          %v769 = vrot.slane %v764, %v768
          %v771 = vadd.f32 %v761, %v769
          %772 = vst [vmem:[%s289] sm:$0xff] %v771
        $region81: #{tpu_custom_call.1} parent=68 // pred_fallthru
          _
        %s773 = sand.u32 %s107, 1
        %s774 = scalar_lea.sflag [#allocation6], %s773
        %s775 = sand.u32 %s107, 1
        %s776 = smul.addr %s775, 8
        %s777 = scalar_lea.vmem [#allocation5], %s776
        // Predicated region
        $region82: #{tpu_custom_call.1} parent=68 // pred_check
          %p778 = pneg %p117
        $region83: #{tpu_custom_call.1} parent=68 // pred_check_branch
          %780 = sbr.rel (%p778) target = $region85
        $region84: #{tpu_custom_call.1} parent=68 // pred_region
          %s782 = ssub.s32 128, 128
          %783 = vsyncadd %s774, %s782
          %s784 = smul.addr %s21, 128
          %s785 = scalar_lea.hbm %s3, %s784
          %s787 = sshll.u32 %s777, 4
          %s788 = int_to_ptr.vmem [resolvable:$true] %s787
          %790 = dma.vmem_to_hbm [thread:$0]  %s788, 128, %s785, %s774
        $region85: #{tpu_custom_call.1} parent=68 // pred_fallthru
          _
      $region69: #{tpu_custom_call.1} parent=5 // pred_fallthru
        _
      %p791 = scmp.le.s32.totalorder 2, %s12
      // Predicated region
      $region86: #{tpu_custom_call.1} parent=5 // pred_check
        %p792 = pneg %p791
      $region87: #{tpu_custom_call.1} parent=5 // pred_check_branch
        %794 = sbr.rel (%p792) target = $region89
      $region88: #{tpu_custom_call.1} parent=5 // pred_region
        %s795 = ssub.s32 %s12, 2
        // Predicated region
        $region90: #{tpu_custom_call.1} parent=88 // pred_check
          %p796 = pneg %p123
        $region91: #{tpu_custom_call.1} parent=88 // pred_check_branch
          %798 = sbr.rel (%p796) target = $region93
        $region92: #{tpu_custom_call.1} parent=88 // pred_region
          %s799 = sand.u32 %s108, 1
          %s800 = scalar_lea.sflag [#allocation6], %s799
          %s801 = sand.u32 %s108, 1
          %s802 = smul.addr %s801, 8
          %s803 = scalar_lea.vmem [#allocation5], %s802
          %804 = dma.done %s800, 128
        $region93: #{tpu_custom_call.1} parent=88 // pred_fallthru
          _
      $region89: #{tpu_custom_call.1} parent=5 // pred_fallthru
        _
    $region6: #{tpu_custom_call.1} parent=1 // loop_footer
      %s16 = sadd.s32 1, %s12
    $region7: #{tpu_custom_call.1} parent=1 // loop_footer_branch
      %11 = sbr.rel target = $region3
    $region8: #{tpu_custom_call.1} parent=1 // loop_exit
      _
    %805 = vsyncpa [#allocation6], 1
    %s806 = scalar_lea.sflag [#allocation6], 1
    %807 = vsyncpa %s806, 1

</llo_original>
